<compile_context>
chip_gen: v5e
topology: v5e:2x2
jax: 0.10.0
libtpu: 0.0.40
codegen_flags: <defaults>
</compile_context>

<pallas_src>
import functools

import jax
import jax.numpy as jnp
from jax.experimental import pallas as pl
from jax.experimental.pallas import tpu as pltpu


# ----------------------------------------------------------------------------
# tiling helpers
# ----------------------------------------------------------------------------

def _pick_tile(full, target, quantum):
    """Largest multiple of `quantum` dividing `full` and <= target (else full)."""
    if full % quantum != 0:
        return full
    t = min(full, max(quantum, (target // quantum) * quantum))
    while full % t != 0:
        t -= quantum
    return t


def _largest_divisor(n, cap, quantum=1):
    """Largest divisor of n that is <= cap and (preferably) a multiple of quantum."""
    cap = max(1, min(int(n), int(cap)))
    best = 0
    for d in range(1, cap + 1):
        if n % d == 0 and d % quantum == 0:
            best = d
    if best == 0:
        for d in range(1, cap + 1):
            if n % d == 0:
                best = d
    return max(1, best)


# ----------------------------------------------------------------------------
# Fused path: writes the final layout directly (no post-kernel transpose).
# Output array is (N, Cout, H, 4W) with lane l = kh*2W + 2j + kw, which is a
# free (contiguous) reshape of (N, Cout, 2H, 2W).
# ----------------------------------------------------------------------------

def _fused_vpu_kernel(x_ref, w_ref, b_ref, o_ref, *, col_chunk, row_chunk):
    # x_ref: (1, Cin, th, W)    f32
    # w_ref: (tco, 4, Cin)      f32, middle axis k = kh*2 + kw
    # b_ref: (tco, 1, 1)        f32
    # o_ref: (1, tco, th, 4W)   f32
    _, cin, th, wf = x_ref.shape
    two_w = 2 * wf
    cw = col_chunk                      # divides W
    rc = row_chunk                      # divides th
    cw4 = 4 * cw

    b3 = b_ref[...]                     # (tco, 1, 1)

    # Tiny per-(ci, kh, kw) weight slabs, shaped for broadcasting: (tco, 1, 1).
    wk = [[w_ref[:, k:k + 1, ci:ci + 1] for k in range(4)] for ci in range(cin)]

    # Lane descriptors for one column chunk: local lane a = kh*2cw + 2*j + kw.
    lane = jax.lax.broadcasted_iota(jnp.int32, (1, 1, cw4), 2)
    is_kh1 = lane >= (2 * cw)
    is_kw1 = (lane % 2) == 1

    # Lane-selected weight vectors, one per input channel: (tco, 1, 4cw).
    wl = []
    for ci in range(cin):
        w00, w01, w10, w11 = wk[ci]
        wk0 = jnp.where(is_kw1, w01, w00)
        wk1 = jnp.where(is_kw1, w11, w10)
        wl.append(jnp.where(is_kh1, wk1, wk0))

    # Exact 0/1 expansion matrix: d4[j, a] = 1 iff j == j_local(a).  (cw, 4cw)
    rr = jax.lax.broadcasted_iota(jnp.int32, (cw, cw4), 0)
    aa = jax.lax.broadcasted_iota(jnp.int32, (cw, cw4), 1)
    kh_a = jnp.where(aa >= (2 * cw), 1, 0)
    j_a = (aa - kh_a * (2 * cw)) // 2
    d4 = jnp.where(rr == j_a, 1.0, 0.0).astype(jnp.float32)

    n_row_chunks = th // rc

    for c0 in range(0, wf, cw):
        def row_body(r, carry, c0=c0):
            start = r * rc
            if rc % 8 == 0:
                start = pl.multiple_of(start, 8)
            rs = pl.ds(start, rc)
            acc = None
            for ci in range(cin):
                xs = x_ref[0, ci, rs, c0:c0 + cw]                    # (rc, cw)
                # duplicate each pixel into its 4 output lanes (exact 0/1 matmul)
                xd = jnp.dot(xs, d4,
                             preferred_element_type=jnp.float32,
                             precision=jax.lax.Precision.HIGHEST)    # (rc, 4cw)
                term = wl[ci] * xd                                    # (tco, rc, 4cw)
                acc = term if acc is None else acc + term
            out = (acc + b3).astype(o_ref.dtype)                      # bias at the end
            if cw == wf:
                # single column chunk: the two kh halves are contiguous
                o_ref[0, :, rs, :] = out
            else:
                o_ref[0, :, rs, 2 * c0: 2 * c0 + 2 * cw] = out[:, :, : 2 * cw]
                o_ref[0, :, rs,
                      two_w + 2 * c0: two_w + 2 * c0 + 2 * cw] = out[:, :, 2 * cw:]
            return carry
        jax.lax.fori_loop(0, n_row_chunks, row_body, 0)


def _upconv_fused(x, w4, b3, *, tco, th, col_chunk, row_chunk):
    N, Cin, H, W = x.shape
    Cout = w4.shape[0]
    W4 = 4 * W
    grid = (N, H // th, Cout // tco)          # channel axis innermost -> x reused

    kernel = functools.partial(_fused_vpu_kernel,
                               col_chunk=col_chunk, row_chunk=row_chunk)

    cost = pl.CostEstimate(
        flops=2 * N * H * W * Cin * Cout * 4,
        transcendentals=0,
        bytes_accessed=(N * Cin * H * W + Cout * Cin * 4 + Cout + N * Cout * H * W4) * 4,
    )

    y4 = pl.pallas_call(
        kernel,
        out_shape=jax.ShapeDtypeStruct((N, Cout, H, W4), x.dtype),
        grid_spec=pltpu.PrefetchScalarGridSpec(
            num_scalar_prefetch=0,
            grid=grid,
            in_specs=[
                pl.BlockSpec((1, Cin, th, W), lambda n, h, c: (n, 0, h, 0)),
                pl.BlockSpec((tco, 4, Cin), lambda n, h, c: (c, 0, 0)),
                pl.BlockSpec((tco, 1, 1), lambda n, h, c: (c, 0, 0)),
            ],
            out_specs=pl.BlockSpec((1, tco, th, W4), lambda n, h, c: (n, c, h, 0)),
        ),
        compiler_params=pltpu.CompilerParams(
            dimension_semantics=("parallel", "parallel", "parallel"),
            vmem_limit_bytes=32 * 1024 * 1024,
        ),
        cost_estimate=cost,
    )(x, w4, b3)

    # Free reshape (row-major identity), NOT a transpose.
    return y4.reshape(N, Cout, 2 * H, 2 * W)


# ----------------------------------------------------------------------------
# Flat-pixel fallback paths (previous layout): pixels on lanes, final 2x2
# interleave done by one XLA transpose.  Used for small/odd W and for the
# large-Cin MXU regime.
# ----------------------------------------------------------------------------

def _flat_vpu_kernel(x_ref, w_ref, b_ref, o_ref):
    # x_ref: (1, Cin, TP); w_ref: (TC, Cin); b_ref: (TC, 1); o_ref: (1, TC, TP)
    cin = x_ref.shape[1]
    tp = o_ref.shape[2]
    lc = min(tp, 256)                          # register-resident lane sub-chunk
    for p0 in range(0, tp, lc):
        pc = min(lc, tp - p0)
        acc = w_ref[:, 0:1] * x_ref[0, 0:1, p0:p0 + pc]      # ci = 0 term
        for ci in range(1, cin):
            acc = acc + w_ref[:, ci:ci + 1] * x_ref[0, ci:ci + 1, p0:p0 + pc]
        o_ref[0, :, p0:p0 + pc] = (acc + b_ref[...]).astype(o_ref.dtype)


def _flat_mxu_kernel(x_ref, w_ref, b_ref, o_ref):
    acc = jnp.dot(w_ref[...], x_ref[0], preferred_element_type=jnp.float32)
    o_ref[0] = (acc + b_ref[...]).astype(o_ref.dtype)


def _upconv_flat(x, weight, bias, *, use_mxu):
    N, Cin, H, W = x.shape
    Cout = weight.shape[1]
    Cout4 = Cout * 4
    P = H * W

    x_flat = x.reshape(N, Cin, P)                          # free contiguous reshape
    w_mat = jnp.transpose(weight.reshape(Cin, Cout4))      # (Cout4, Cin); rows = (co,kh,kw)
    b_col = jnp.repeat(bias, 4).reshape(Cout4, 1)

    if use_mxu:
        # shrink pixel tile with Cin so the double-buffered x block fits VMEM
        pixel_tile = max(256, min(2048, (8 * 1024 * 1024) // max(1, Cin * 8)))
        co_tile = 128
    else:
        pixel_tile = 1024
        co_tile = 32

    tp = _pick_tile(P, pixel_tile, 128)
    tc = _pick_tile(Cout4, co_tile, 8)
    grid = (N, P // tp, Cout4 // tc)            # channel axis innermost -> x reused

    kernel_fn = _flat_mxu_kernel if use_mxu else _flat_vpu_kernel

    cost = pl.CostEstimate(
        flops=2 * N * P * Cin * Cout4,
        transcendentals=0,
        bytes_accessed=(N * Cin * P + Cout4 * Cin + Cout4 + N * Cout4 * P) * 4,
    )

    y_flat = pl.pallas_call(
        kernel_fn,
        out_shape=jax.ShapeDtypeStruct((N, Cout4, P), x.dtype),
        grid_spec=pltpu.PrefetchScalarGridSpec(
            num_scalar_prefetch=0,
            grid=grid,
            in_specs=[
                pl.BlockSpec((1, Cin, tp), lambda n, p, c: (n, 0, p)),
                pl.BlockSpec((tc, Cin), lambda n, p, c: (c, 0)),
                pl.BlockSpec((tc, 1), lambda n, p, c: (c, 0)),
            ],
            out_specs=pl.BlockSpec((1, tc, tp), lambda n, p, c: (n, c, p)),
        ),
        compiler_params=pltpu.CompilerParams(
            dimension_semantics=("parallel", "parallel", "parallel"),
            vmem_limit_bytes=32 * 1024 * 1024,
        ),
        cost_estimate=cost,
    )(x_flat, w_mat, b_col)

    # TODO(synk): this path still pays one XLA transpose over the output; it is
    # only used for lane-narrow W (W % 32 != 0) and the large-Cin MXU regime.
    y = y_flat.reshape(N, Cout, 2, 2, H, W)
    y = jnp.transpose(y, (0, 1, 4, 2, 5, 3)).reshape(N, Cout, 2 * H, 2 * W)
    return y


# ----------------------------------------------------------------------------
# top-level forward
# ----------------------------------------------------------------------------

def upconv_forward(x, weight, bias):
    """ConvTranspose2d(kernel=(2,2), stride=(2,2)) forward.

    x:      (N, Cin, H, W)     float32  (NCHW, PyTorch convention)
    weight: (Cin, Cout, 2, 2)  float32  (PyTorch ConvTranspose2d layout)
    bias:   (Cout,)            float32
    returns (N, Cout, 2H, 2W)  float32
    """
    N, Cin, H, W = x.shape
    Cout = weight.shape[1]

    use_mxu = Cin >= 64                               # contraction worth the MXU
    fused_ok = (not use_mxu) and (W % 32 == 0)        # lane-aligned fused stores

    if not fused_ok:
        return _upconv_flat(x, weight, bias, use_mxu=use_mxu)

    # ---- fused-path tiling (register-resident chunks, VMEM-bounded blocks) ----
    tco = _largest_divisor(Cout, 8)                   # acc stays <= ~16 vregs
    col_chunk = _largest_divisor(W, 64)               # 4*col_chunk <= 256 lanes
    bytes_per_row = 8 * W * (Cin + 4 * tco)           # x + out, double buffered
    th_vmem = max(8, (12 * 1024 * 1024) // max(1, bytes_per_row))
    th_target = max(8, (1 << 20) // max(1, tco * 4 * W * 4))
    th = _largest_divisor(H, min(H, 64, th_vmem, th_target), quantum=8)
    row_chunk = _largest_divisor(th, 8)

    if (Cin * th * W + tco * th * 4 * W) * 8 > 24 * 1024 * 1024:
        return _upconv_flat(x, weight, bias, use_mxu=False)   # degenerate shapes

    # weight as (Cout, 4, Cin) with k = kh*2 + kw ; bias as (Cout, 1, 1)
    w4 = jnp.transpose(weight, (1, 2, 3, 0)).reshape(Cout, 4, Cin)
    b3 = bias.reshape(Cout, 1, 1)
    return _upconv_fused(x, w4, b3, tco=tco, th=th,
                         col_chunk=col_chunk, row_chunk=row_chunk)


# ----------------------------------------------------------------------------
# reference + test
# ----------------------------------------------------------------------------

def upconv_reference(x, weight, bias):
    # pure-JAX reference with exact ConvTranspose2d(k=2, s=2) semantics
    N, Cin, H, W = x.shape
    Cout = weight.shape[1]
    y = jnp.einsum('ncij,cokl->noikjl', x, weight,
                   precision=jax.lax.Precision.HIGHEST)
    y = y.reshape(N, Cout, 2 * H, 2 * W) + bias[None, :, None, None]
    return y


if __name__ == "__main__":
    master = jax.random.PRNGKey(0)

    def run_case(case_key, N, Cin, Cout, H, W, tol):
        k_x, k_w, k_b = jax.random.split(case_key, 3)
        x = jax.random.normal(k_x, (N, Cin, H, W), dtype=jnp.float32)
        fan = Cin * 2 * 2
        bound = 1.0 / (fan ** 0.5)
        weight = jax.random.uniform(k_w, (Cin, Cout, 2, 2), jnp.float32, -bound, bound)
        bias = jax.random.uniform(k_b, (Cout,), jnp.float32, -bound, bound)

        out = jax.block_until_ready(upconv_forward(x, weight, bias))
        ref = upconv_reference(x, weight, bias)
        assert out.shape == (N, Cout, 2 * H, 2 * W)
        err = float(jnp.max(jnp.abs(out - ref)))
        assert jnp.allclose(out, ref, atol=tol, rtol=tol), (
            f"mismatch N={N} Cin={Cin} Cout={Cout} H={H} W={W}: max abs err {err}")

    keys = jax.random.split(master, 4)
    # primary module-sized case (small W -> lane-dense flat fallback path)
    run_case(keys[0], N=2, Cin=4, Cout=8, H=16, W=16, tol=1e-5)
    # lane-aligned case exercising the fused kernel (no post-kernel transpose)
    run_case(keys[1], N=1, Cin=4, Cout=8, H=8, W=64, tol=1e-5)
    # odd channel counts on the fused path
    run_case(keys[2], N=1, Cin=3, Cout=5, H=16, W=32, tol=1e-5)
    # larger contraction: MXU path (default-precision f32 matmul -> looser tol)
    run_case(keys[3], N=1, Cin=64, Cout=4, H=8, W=8, tol=2e-2)

    print("KERNEL_OK")
</pallas_src>

<mosaic_0001>
module attributes {stable_mosaic.version = 11 : i64} {
  func.func @_flat_vpu_kernel(%arg0: i32, %arg1: i32, %arg2: i32, %arg3: memref<1x4x256xf32, #tpu.memory_space<vmem>>, %arg4: memref<32x4xf32, #tpu.memory_space<vmem>>, %arg5: memref<32x1xf32, #tpu.memory_space<vmem>>, %arg6: memref<1x32x256xf32, #tpu.memory_space<vmem>>) attributes {dimension_semantics = [#tpu.dimension_semantics<parallel>, #tpu.dimension_semantics<parallel>, #tpu.dimension_semantics<parallel>], iteration_bounds = array<i64: 2, 1, 1>, scalar_prefetch = 0 : i64, scratch_operands = 0 : i64, tpu.core_type = #tpu.core_type<tc>, window_params = [{transform_indices = @transform_0, window_bounds = array<i64: 1, 4, 256>}, {transform_indices = @transform_1, window_bounds = array<i64: 32, 4>}, {transform_indices = @transform_2, window_bounds = array<i64: 32, 1>}, {transform_indices = @transform_3, window_bounds = array<i64: 1, 32, 256>}]} {
    %c0 = arith.constant 0 : index
    %c0_0 = arith.constant 0 : index
    %0 = vector.load %arg4[%c0, %c0_0] : memref<32x4xf32, #tpu.memory_space<vmem>>, vector<32x1xf32>
    %c0_1 = arith.constant 0 : index
    %c0_2 = arith.constant 0 : index
    %c0_3 = arith.constant 0 : index
    %1 = vector.load %arg3[%c0_1, %c0_2, %c0_3] : memref<1x4x256xf32, #tpu.memory_space<vmem>>, vector<1x1x256xf32>
    %2 = vector.shape_cast %1 : vector<1x1x256xf32> to vector<1x256xf32>
    %3 = vector.broadcast %0 : vector<32x1xf32> to vector<32x256xf32>
    %4 = vector.broadcast %2 : vector<1x256xf32> to vector<32x256xf32>
    %5 = arith.mulf %3, %4 : vector<32x256xf32>
    %c0_4 = arith.constant 0 : index
    %c1 = arith.constant 1 : index
    %6 = vector.load %arg4[%c0_4, %c1] : memref<32x4xf32, #tpu.memory_space<vmem>>, vector<32x1xf32>
    %c0_5 = arith.constant 0 : index
    %c1_6 = arith.constant 1 : index
    %c0_7 = arith.constant 0 : index
    %7 = vector.load %arg3[%c0_5, %c1_6, %c0_7] : memref<1x4x256xf32, #tpu.memory_space<vmem>>, vector<1x1x256xf32>
    %8 = vector.shape_cast %7 : vector<1x1x256xf32> to vector<1x256xf32>
    %9 = vector.broadcast %6 : vector<32x1xf32> to vector<32x256xf32>
    %10 = vector.broadcast %8 : vector<1x256xf32> to vector<32x256xf32>
    %11 = arith.mulf %9, %10 : vector<32x256xf32>
    %12 = arith.addf %5, %11 : vector<32x256xf32>
    %c0_8 = arith.constant 0 : index
    %c2 = arith.constant 2 : index
    %13 = vector.load %arg4[%c0_8, %c2] : memref<32x4xf32, #tpu.memory_space<vmem>>, vector<32x1xf32>
    %c0_9 = arith.constant 0 : index
    %c2_10 = arith.constant 2 : index
    %c0_11 = arith.constant 0 : index
    %14 = vector.load %arg3[%c0_9, %c2_10, %c0_11] : memref<1x4x256xf32, #tpu.memory_space<vmem>>, vector<1x1x256xf32>
    %15 = vector.shape_cast %14 : vector<1x1x256xf32> to vector<1x256xf32>
    %16 = vector.broadcast %13 : vector<32x1xf32> to vector<32x256xf32>
    %17 = vector.broadcast %15 : vector<1x256xf32> to vector<32x256xf32>
    %18 = arith.mulf %16, %17 : vector<32x256xf32>
    %19 = arith.addf %12, %18 : vector<32x256xf32>
    %c0_12 = arith.constant 0 : index
    %c3 = arith.constant 3 : index
    %20 = vector.load %arg4[%c0_12, %c3] : memref<32x4xf32, #tpu.memory_space<vmem>>, vector<32x1xf32>
    %c0_13 = arith.constant 0 : index
    %c3_14 = arith.constant 3 : index
    %c0_15 = arith.constant 0 : index
    %21 = vector.load %arg3[%c0_13, %c3_14, %c0_15] : memref<1x4x256xf32, #tpu.memory_space<vmem>>, vector<1x1x256xf32>
    %22 = vector.shape_cast %21 : vector<1x1x256xf32> to vector<1x256xf32>
    %23 = vector.broadcast %20 : vector<32x1xf32> to vector<32x256xf32>
    %24 = vector.broadcast %22 : vector<1x256xf32> to vector<32x256xf32>
    %25 = arith.mulf %23, %24 : vector<32x256xf32>
    %26 = arith.addf %19, %25 : vector<32x256xf32>
    %c0_16 = arith.constant 0 : index
    %c0_17 = arith.constant 0 : index
    %27 = vector.load %arg5[%c0_16, %c0_17] : memref<32x1xf32, #tpu.memory_space<vmem>>, vector<32x1xf32>
    %28 = vector.broadcast %27 : vector<32x1xf32> to vector<32x256xf32>
    %29 = arith.addf %26, %28 : vector<32x256xf32>
    %c0_18 = arith.constant 0 : index
    %c0_19 = arith.constant 0 : index
    %c0_20 = arith.constant 0 : index
    %30 = vector.load %arg6[%c0_18, %c0_19, %c0_20] : memref<1x32x256xf32, #tpu.memory_space<vmem>>, vector<1x32x256xf32>
    %31 = vector.shape_cast %30 : vector<1x32x256xf32> to vector<32x256xf32>
    %32 = vector.shape_cast %29 : vector<32x256xf32> to vector<1x32x256xf32>
    tpu.vector_store %arg6[%c0_18, %c0_19, %c0_20], %32 {strides = array<i32>} : memref<1x32x256xf32, #tpu.memory_space<vmem>>, vector<1x32x256xf32>,
    return
  }
  func.func @transform_0(%arg0: i32, %arg1: i32, %arg2: i32) -> (i32, i32, i32) {
    %c0_i32 = arith.constant 0 : i32
    %c0_i32_0 = arith.constant 0 : i32
    return %arg0, %c0_i32, %arg1 : i32, i32, i32
  }
  func.func @transform_1(%arg0: i32, %arg1: i32, %arg2: i32) -> (i32, i32) {
    %c0_i32 = arith.constant 0 : i32
    %c0_i32_0 = arith.constant 0 : i32
    return %arg2, %c0_i32 : i32, i32
  }
  func.func @transform_2(%arg0: i32, %arg1: i32, %arg2: i32) -> (i32, i32) {
    %c0_i32 = arith.constant 0 : i32
    %c0_i32_0 = arith.constant 0 : i32
    return %arg2, %c0_i32 : i32, i32
  }
  func.func @transform_3(%arg0: i32, %arg1: i32, %arg2: i32) -> (i32, i32, i32) {
    %c0_i32 = arith.constant 0 : i32
    return %arg0, %arg2, %arg1 : i32, i32, i32
  }
}

</mosaic_0001>

<llo_original>
// kernel: tpu_custom_call.1
$region0: #{tpu_custom_call.1}
  #allocation0 [shape = 'u32[]', space=smem, size = 0x4, offset = 0x4, fixed_abs, tag = 'smem constant byte address 0x4 - core index']
  #allocation1 [shape = 'u32[72,128]{1,0:T(1,128)}', space=vmem, size = 0x9000, scoped, tag = 'internal scratch']
  %s0 = inlined_call_operand.vmem [shape: f32[2,4,256], index: 0, kind: input, shape index: {}]
  %s1 = inlined_call_operand.vmem [shape: f32[32,4], index: 1, kind: input, shape index: {}]
  %s2 = inlined_call_operand.vmem [shape: f32[32,1], index: 2, kind: input, shape index: {}]
  %s3 = inlined_call_operand.hbm [shape: f32[2,32,256], index: 3, kind: output, shape index: {}]
  %s4 = sld [smem:[#allocation0]]
  $region45: #{tpu_custom_call.1} parent=0
    _
  %s6 = ssub.s32 1, %s4
  %s7 = scalar_select 0, %s6, %s4
  $region1: #{tpu_custom_call.1} parent=0
    #allocation2 [shape = 'u8[65536]{0}', space=vmem, size = 0x10000, scoped, tag = 'output window, operand 0']
    #allocation3 [shape = 's32[2]{0}', space=sflag, size = 0x8, scoped, tag = 'scoped memory for tpu_custom_call.1']
    %8 = vsyncpa [#allocation3], 0
    %s9 = scalar_lea.sflag [#allocation3], 1
    %10 = vsyncpa %s9, 0
    loop: start=0, step=1, limit=4
    $region2: #{tpu_custom_call.1} parent=1 // loop_pre_header
      _
    $region3: #{tpu_custom_call.1} parent=1 // loop_header
      %s12 = sphi 0, %s16
      %p13 = scmp.ge.s32.totalorder %s12, 4
      %s19 = sphi 0, %s38
      %s20 = sphi 0, %s34
      %s21 = sphi 0, %s30
      %s22 = sphi 0, %s19
      %s23 = sphi 0, %s20
      %s24 = sphi 0, %s21
      %s25 = sphi 0, %s22
      %s26 = sphi 0, %s23
      %s27 = sphi 0, %s24
      %s43 = sphi 0, %s45
      %s46 = sphi 0, %s43
      %s47 = sphi 0, %s46
      %s63 = sphi 0, %s47
      %s69 = sphi 0, %s71
      %s72 = sphi 0, %s69
      %s73 = sphi 0, %s72
      %s89 = sphi 0, %s73
      %s95 = sphi 0, %s97
      %s98 = sphi 0, %s95
      %s99 = sphi 0, %s98
      %s115 = sphi 0, %s99
      %s125 = sphi 0, %s127
      %s128 = sphi 0, %s125
      %s129 = sphi 0, %s128
      %s145 = sphi 0, %s129
    $region4: #{tpu_custom_call.1} parent=1 // loop_header_branch
      %15 = sbr.rel (%p13) target = $region8
    $region5: #{tpu_custom_call.1} parent=1 // loop_body
      %s17 = ssub.s32 %s12, 1
      %s18 = ssub.s32 %s12, 2
      %s28 = sadd.s32 1, %s21
      %p29 = scmp.ge.s32.totalorder %s28, 1
      %s30 = scalar_select %p29, 0, %s28
      %s31 = sadd.s32 1, %s20
      %s32 = scalar_select %p29, %s31, %s20
      %p33 = scmp.ge.s32.totalorder %s32, 1
      %s34 = scalar_select %p33, 0, %s32
      %s35 = sadd.s32 1, %s19
      %s36 = scalar_select %p33, %s35, %s19
      %p37 = scmp.ge.s32.totalorder %s36, 2
      %s38 = scalar_select %p37, 0, %s36
      %s39 = ssub.s32 %s19, %s38
      %s40 = ssub.s32 %s20, %s34
      %s41 = sor.u32 %s39, %s40
      %p42 = scmp.eq.s32.totalorder %s41, 0
      %s44 = sadd.s32 %s43, 1
      %s45 = scalar_select %p42, %s43, %s44
      %p48 = pneg %p42
      %p49 = scmp.eq.s32.totalorder %s12, 1
      %p50 = por %p48, %p49
      %p51 = scmp.ne.s32.totalorder %s43, %s46
      %p52 = scmp.eq.s32.totalorder %s12, 0
      %p53 = por %p51, %p52
      %p54 = scmp.ne.s32.totalorder %s43, %s46
      %p55 = scmp.eq.s32.totalorder %s17, 1
      %p56 = por %p54, %p55
      %p57 = scmp.ne.s32.totalorder %s46, %s47
      %p58 = scmp.eq.s32.totalorder %s17, 0
      %p59 = por %p57, %p58
      %p60 = scmp.ne.s32.totalorder %s46, %s47
      %p61 = scmp.eq.s32.totalorder %s18, 1
      %p62 = por %p60, %p61
      %p64 = scmp.ne.s32.totalorder %s47, %s63
      %p65 = scmp.eq.s32.totalorder %s18, 0
      %p66 = por %p64, %p65
      %s67 = ssub.s32 %s21, %s30
      %p68 = scmp.eq.s32.totalorder %s67, 0
      %s70 = sadd.s32 %s69, 1
      %s71 = scalar_select %p68, %s69, %s70
      %p74 = pneg %p68
      %p75 = scmp.eq.s32.totalorder %s12, 1
      %p76 = por %p74, %p75
      %p77 = scmp.ne.s32.totalorder %s69, %s72
      %p78 = scmp.eq.s32.totalorder %s12, 0
      %p79 = por %p77, %p78
      %p80 = scmp.ne.s32.totalorder %s69, %s72
      %p81 = scmp.eq.s32.totalorder %s17, 1
      %p82 = por %p80, %p81
      %p83 = scmp.ne.s32.totalorder %s72, %s73
      %p84 = scmp.eq.s32.totalorder %s17, 0
      %p85 = por %p83, %p84
      %p86 = scmp.ne.s32.totalorder %s72, %s73
      %p87 = scmp.eq.s32.totalorder %s18, 1
      %p88 = por %p86, %p87
      %p90 = scmp.ne.s32.totalorder %s73, %s89
      %p91 = scmp.eq.s32.totalorder %s18, 0
      %p92 = por %p90, %p91
      %s93 = ssub.s32 %s21, %s30
      %p94 = scmp.eq.s32.totalorder %s93, 0
      %s96 = sadd.s32 %s95, 1
      %s97 = scalar_select %p94, %s95, %s96
      %p100 = pneg %p94
      %p101 = scmp.eq.s32.totalorder %s12, 1
      %p102 = por %p100, %p101
      %p103 = scmp.ne.s32.totalorder %s95, %s98
      %p104 = scmp.eq.s32.totalorder %s12, 0
      %p105 = por %p103, %p104
      %p106 = scmp.ne.s32.totalorder %s95, %s98
      %p107 = scmp.eq.s32.totalorder %s17, 1
      %p108 = por %p106, %p107
      %p109 = scmp.ne.s32.totalorder %s98, %s99
      %p110 = scmp.eq.s32.totalorder %s17, 0
      %p111 = por %p109, %p110
      %p112 = scmp.ne.s32.totalorder %s98, %s99
      %p113 = scmp.eq.s32.totalorder %s18, 1
      %p114 = por %p112, %p113
      %p116 = scmp.ne.s32.totalorder %s99, %s115
      %p117 = scmp.eq.s32.totalorder %s18, 0
      %p118 = por %p116, %p117
      %s119 = ssub.s32 %s19, %s38
      %s120 = ssub.s32 %s21, %s30
      %s121 = sor.u32 %s119, %s120
      %s122 = ssub.s32 %s20, %s34
      %s123 = sor.u32 %s121, %s122
      %p124 = scmp.eq.s32.totalorder %s123, 0
      %s126 = sadd.s32 %s125, 1
      %s127 = scalar_select %p124, %s125, %s126
      %p130 = pneg %p124
      %p131 = scmp.eq.s32.totalorder %s12, 1
      %p132 = por %p130, %p131
      %p133 = scmp.ne.s32.totalorder %s125, %s128
      %p134 = scmp.eq.s32.totalorder %s12, 0
      %p135 = por %p133, %p134
      %p136 = scmp.ne.s32.totalorder %s125, %s128
      %p137 = scmp.eq.s32.totalorder %s17, 1
      %p138 = por %p136, %p137
      %p139 = scmp.ne.s32.totalorder %s128, %s129
      %p140 = scmp.eq.s32.totalorder %s17, 0
      %p141 = por %p139, %p140
      %p142 = scmp.ne.s32.totalorder %s128, %s129
      %p143 = scmp.eq.s32.totalorder %s18, 1
      %p144 = por %p142, %p143
      %p146 = scmp.ne.s32.totalorder %s129, %s145
      %p147 = scmp.eq.s32.totalorder %s18, 0
      %p148 = por %p146, %p147
      %p149 = scmp.le.s32.totalorder 1, %s12
      %p150 = scmp.lt.s32.totalorder %s12, 3
      %p151 = pnand %p149, %p150
      %p152 = pneg %p151
      // Predicated region
      $region9: #{tpu_custom_call.1} parent=5 // pred_check
        _
      $region10: #{tpu_custom_call.1} parent=5 // pred_check_branch
        %154 = sbr.rel (%p151) target = $region12
      $region11: #{tpu_custom_call.1} parent=5 // pred_region
        %s155 = ssub.s32 %s12, 1
        // Predicated region
        $region13: #{tpu_custom_call.1} parent=11 // pred_check
          %p156 = pneg %p85
        $region14: #{tpu_custom_call.1} parent=11 // pred_check_branch
          %158 = sbr.rel (%p156) target = $region16
        $region15: #{tpu_custom_call.1} parent=11 // pred_region
          %s159 = smul.u32 4, %s24
          %p160 = scmp.lt.s32.totalorder %s159, 3
          %s161 = scalar_select %p160, %s159, 3
          %s162 = smul.addr %s161, 8
          %s163 = scalar_lea.vmem %s1, %s162
          %s164 = smul.u32 4, %s24
        $region16: #{tpu_custom_call.1} parent=11 // pred_fallthru
          _
        // Predicated region
        $region17: #{tpu_custom_call.1} parent=11 // pred_check
          %p165 = pneg %p111
        $region18: #{tpu_custom_call.1} parent=11 // pred_check_branch
          %167 = sbr.rel (%p165) target = $region20
        $region19: #{tpu_custom_call.1} parent=11 // pred_region
          %s168 = smul.u32 4, %s24
          %p169 = scmp.lt.s32.totalorder %s168, 3
          %s170 = scalar_select %p169, %s168, 3
          %s171 = smul.addr %s170, 8
          %s172 = scalar_lea.vmem %s2, %s171
          %s173 = smul.u32 4, %s24
        $region20: #{tpu_custom_call.1} parent=11 // pred_fallthru
          _
      $region12: #{tpu_custom_call.1} parent=5 // pred_fallthru
        _
      %p174 = scmp.lt.s32.totalorder %s12, 2
      // Predicated region
      $region21: #{tpu_custom_call.1} parent=5 // pred_check
        %p175 = pneg %p174
      $region22: #{tpu_custom_call.1} parent=5 // pred_check_branch
        %177 = sbr.rel (%p175) target = $region24
      $region23: #{tpu_custom_call.1} parent=5 // pred_region
        // Predicated region
        $region25: #{tpu_custom_call.1} parent=23 // pred_check
          %p178 = pneg %p53
        $region26: #{tpu_custom_call.1} parent=23 // pred_check_branch
          %180 = sbr.rel (%p178) target = $region28
        $region27: #{tpu_custom_call.1} parent=23 // pred_region
          %s181 = smul.u32 2, %s20
          %p182 = scmp.lt.s32.totalorder %s19, 1
          %s183 = scalar_select %p182, %s19, 1
          %p184 = scmp.lt.s32.totalorder %s181, 1
          %s185 = scalar_select %p184, %s181, 1
          %s186 = smul.addr %s183, 2
          %s187 = sadd.s32 %s185, %s186
          %s188 = smul.addr %s187, 4
          %s189 = scalar_lea.vmem %s0, %s188
          %s190 = smul.u32 2, %s20
        $region28: #{tpu_custom_call.1} parent=23 // pred_fallthru
          _
      $region24: #{tpu_custom_call.1} parent=5 // pred_fallthru
        _
      %p191 = scmp.le.s32.totalorder 1, %s12
      %p192 = scmp.lt.s32.totalorder %s12, 3
      %p193 = pnand %p191, %p192
      %p194 = pneg %p193
      // Predicated region
      $region29: #{tpu_custom_call.1} parent=5 // pred_check
        _
      $region30: #{tpu_custom_call.1} parent=5 // pred_check_branch
        %196 = sbr.rel (%p193) target = $region32
      $region31: #{tpu_custom_call.1} parent=5 // pred_region
        %s197 = ssub.s32 %s12, 1
        %s198 = smul.u32 2, %s23
        %p199 = scmp.lt.s32.totalorder %s22, 1
        %s200 = scalar_select %p199, %s22, 1
        %p201 = scmp.lt.s32.totalorder %s198, 1
        %s202 = scalar_select %p201, %s198, 1
        %s203 = smul.addr %s200, 2
        %s204 = sadd.s32 %s202, %s203
        %s205 = smul.addr %s204, 4
        %s206 = scalar_lea.vmem %s0, %s205
        %p207 = pneg %p59
        %p208 = pneg %p56
        %s209 = smul.u32 4, %s24
        %p210 = scmp.lt.s32.totalorder %s209, 3
        %s211 = scalar_select %p210, %s209, 3
        %s212 = smul.addr %s211, 8
        %s213 = scalar_lea.vmem %s1, %s212
        %p214 = pneg %p85
        %p215 = pneg %p82
        %s216 = smul.u32 4, %s24
        %p217 = scmp.lt.s32.totalorder %s216, 3
        %s218 = scalar_select %p217, %s216, 3
        %s219 = smul.addr %s218, 8
        %s220 = scalar_lea.vmem %s2, %s219
        %p221 = pneg %p111
        %p222 = pneg %p108
        %p223 = pneg %p141
        %p224 = pneg %p138
        %s225 = sand.u32 %s128, 1
        %s226 = scalar_lea.sflag [#allocation3], %s225
        %s227 = sand.u32 %s128, 1
        %s228 = smul.addr %s227, 64
        %s229 = scalar_lea.vmem [#allocation2], %s228
        %s230 = smul.u32 2, %s23
        %p231 = scmp.lt.s32.totalorder %s22, 1
        %s232 = scalar_select %p231, %s22, 1
        %p233 = scmp.lt.s32.totalorder %s230, 1
        %s234 = scalar_select %p233, %s230, 1
        %s235 = smul.addr %s232, 2
        %s236 = sadd.s32 %s234, %s235
        %s237 = smul.addr %s236, 4
        %s238 = scalar_lea.vmem %s0, %s237
        %s239 = smul.u32 2, %s23
        %s240 = smul.u32 4, %s24
        %p241 = scmp.lt.s32.totalorder %s240, 3
        %s242 = scalar_select %p241, %s240, 3
        %s243 = smul.addr %s242, 8
        %s244 = scalar_lea.vmem %s1, %s243
        %s245 = smul.u32 4, %s24
        %s246 = smul.u32 4, %s24
        %p247 = scmp.lt.s32.totalorder %s246, 3
        %s248 = scalar_select %p247, %s246, 3
        %s249 = smul.addr %s248, 8
        %s250 = scalar_lea.vmem %s2, %s249
        %s251 = smul.u32 4, %s24
        %s252 = smul.u32 4, %s24
        %s253 = smul.u32 2, %s23
        %v254 = vld [vmem:[%s244] sm:$0xff]
        %v255 = vld [vmem:[%s244 + $0x8] sm:$0xff]
        %v256 = vld [vmem:[%s244 + $0x10] sm:$0xff]
        %v257 = vld [vmem:[%s244 + $0x18] sm:$0xff]
        %v258 = vld [vmem:[%s238] ss:$4 sm:$0x3]
        %260 = vset.pattern.permute.xlu0 0
        %261 = vperm.xlu0 %260, %v254
        %v262 = vpop.permute.xlu0 %261
        %265 = vset.pattern.permute.xlu0 0
        %266 = vperm.xlu0 %265, %v255
        %v267 = vpop.permute.xlu0 %266
        %270 = vset.pattern.permute.xlu0 0
        %271 = vperm.xlu0 %270, %v256
        %v272 = vpop.permute.xlu0 %271
        %275 = vset.pattern.permute.xlu0 0
        %276 = vperm.xlu0 %275, %v257
        %v277 = vpop.permute.xlu0 %276
        %v280 = vperm.slane %v258, 0
        %v281 = vperm.slane %v258, 1
        %v284 = vmul.f32 %v262, %v280
        %v285 = vmul.f32 %v262, %v281
        %v286 = vmul.f32 %v267, %v280
        %v287 = vmul.f32 %v267, %v281
        %v288 = vmul.f32 %v272, %v280
        %v289 = vmul.f32 %v272, %v281
        %v290 = vmul.f32 %v277, %v280
        %v291 = vmul.f32 %v277, %v281
        %s292 = scalar_lea.vmem %s238, 1
        %v293 = vld [vmem:[%s292] ss:$4 sm:$0x3]
        %294 = vset.pattern.permute.xlu0 1
        %295 = vperm.xlu0 %294, %v254
        %v296 = vpop.permute.xlu0 %295
        %298 = vset.pattern.permute.xlu0 1
        %299 = vperm.xlu0 %298, %v255
        %v300 = vpop.permute.xlu0 %299
        %302 = vset.pattern.permute.xlu0 1
        %303 = vperm.xlu0 %302, %v256
        %v304 = vpop.permute.xlu0 %303
        %306 = vset.pattern.permute.xlu0 1
        %307 = vperm.xlu0 %306, %v257
        %v308 = vpop.permute.xlu0 %307
        %v311 = vperm.slane %v293, 0
        %v312 = vperm.slane %v293, 1
        %v315 = vmul.f32 %v296, %v311
        %v316 = vmul.f32 %v296, %v312
        %v317 = vmul.f32 %v300, %v311
        %v318 = vmul.f32 %v300, %v312
        %v319 = vmul.f32 %v304, %v311
        %v320 = vmul.f32 %v304, %v312
        %v321 = vmul.f32 %v308, %v311
        %v322 = vmul.f32 %v308, %v312
        %v323 = vadd.f32 %v284, %v315
        %v324 = vadd.f32 %v285, %v316
        %v325 = vadd.f32 %v286, %v317
        %v326 = vadd.f32 %v287, %v318
        %v327 = vadd.f32 %v288, %v319
        %v328 = vadd.f32 %v289, %v320
        %v329 = vadd.f32 %v290, %v321
        %v330 = vadd.f32 %v291, %v322
        %s331 = scalar_lea.vmem %s238, 2
        %v332 = vld [vmem:[%s331] ss:$4 sm:$0x3]
        %333 = vset.pattern.permute.xlu0 2
        %334 = vperm.xlu0 %333, %v254
        %v335 = vpop.permute.xlu0 %334
        %337 = vset.pattern.permute.xlu0 2
        %338 = vperm.xlu0 %337, %v255
        %v339 = vpop.permute.xlu0 %338
        %341 = vset.pattern.permute.xlu0 2
        %342 = vperm.xlu0 %341, %v256
        %v343 = vpop.permute.xlu0 %342
        %345 = vset.pattern.permute.xlu0 2
        %346 = vperm.xlu0 %345, %v257
        %v347 = vpop.permute.xlu0 %346
        %v350 = vperm.slane %v332, 0
        %v351 = vperm.slane %v332, 1
        %v354 = vmul.f32 %v335, %v350
        %v355 = vmul.f32 %v335, %v351
        %v356 = vmul.f32 %v339, %v350
        %v357 = vmul.f32 %v339, %v351
        %v358 = vmul.f32 %v343, %v350
        %v359 = vmul.f32 %v343, %v351
        %v360 = vmul.f32 %v347, %v350
        %v361 = vmul.f32 %v347, %v351
        %v362 = vadd.f32 %v323, %v354
        %v363 = vadd.f32 %v324, %v355
        %v364 = vadd.f32 %v325, %v356
        %v365 = vadd.f32 %v326, %v357
        %v366 = vadd.f32 %v327, %v358
        %v367 = vadd.f32 %v328, %v359
        %v368 = vadd.f32 %v329, %v360
        %v369 = vadd.f32 %v330, %v361
        %s370 = scalar_lea.vmem %s238, 3
        %v371 = vld [vmem:[%s370] ss:$4 sm:$0x3]
        %372 = vset.pattern.permute.xlu0 3
        %373 = vperm.xlu0 %372, %v254
        %v374 = vpop.permute.xlu0 %373
        %376 = vset.pattern.permute.xlu0 3
        %377 = vperm.xlu0 %376, %v255
        %v378 = vpop.permute.xlu0 %377
        %380 = vset.pattern.permute.xlu0 3
        %381 = vperm.xlu0 %380, %v256
        %v382 = vpop.permute.xlu0 %381
        %384 = vset.pattern.permute.xlu0 3
        %385 = vperm.xlu0 %384, %v257
        %v386 = vpop.permute.xlu0 %385
        %v389 = vperm.slane %v371, 0
        %v390 = vperm.slane %v371, 1
        %v393 = vmul.f32 %v374, %v389
        %v394 = vmul.f32 %v374, %v390
        %v395 = vmul.f32 %v378, %v389
        %v396 = vmul.f32 %v378, %v390
        %v397 = vmul.f32 %v382, %v389
        %v398 = vmul.f32 %v382, %v390
        %v399 = vmul.f32 %v386, %v389
        %v400 = vmul.f32 %v386, %v390
        %v401 = vadd.f32 %v362, %v393
        %v402 = vadd.f32 %v363, %v394
        %v403 = vadd.f32 %v364, %v395
        %v404 = vadd.f32 %v365, %v396
        %v405 = vadd.f32 %v366, %v397
        %v406 = vadd.f32 %v367, %v398
        %v407 = vadd.f32 %v368, %v399
        %v408 = vadd.f32 %v369, %v400
        %v409 = vld [vmem:[%s250] sm:$0xff]
        %v410 = vld [vmem:[%s250 + $0x8] sm:$0xff]
        %v411 = vld [vmem:[%s250 + $0x10] sm:$0xff]
        %v412 = vld [vmem:[%s250 + $0x18] sm:$0xff]
        %414 = vset.pattern.permute.xlu0 0
        %415 = vperm.xlu0 %414, %v409
        %v416 = vpop.permute.xlu0 %415
        %419 = vset.pattern.permute.xlu0 0
        %420 = vperm.xlu0 %419, %v410
        %v421 = vpop.permute.xlu0 %420
        %424 = vset.pattern.permute.xlu0 0
        %425 = vperm.xlu0 %424, %v411
        %v426 = vpop.permute.xlu0 %425
        %429 = vset.pattern.permute.xlu0 0
        %430 = vperm.xlu0 %429, %v412
        %v431 = vpop.permute.xlu0 %430
        %v433 = vadd.f32 %v401, %v416
        %v434 = vadd.f32 %v402, %v416
        %v435 = vadd.f32 %v403, %v421
        %v436 = vadd.f32 %v404, %v421
        %v437 = vadd.f32 %v405, %v426
        %v438 = vadd.f32 %v406, %v426
        %v439 = vadd.f32 %v407, %v431
        %v440 = vadd.f32 %v408, %v431
        %441 = vst [vmem:[%s229] sm:$0xff] %v433
        %442 = vst [vmem:[%s229 + $0x8] sm:$0xff] %v434
        %443 = vst [vmem:[%s229 + $0x10] sm:$0xff] %v435
        %444 = vst [vmem:[%s229 + $0x18] sm:$0xff] %v436
        %445 = vst [vmem:[%s229 + $0x20] sm:$0xff] %v437
        %446 = vst [vmem:[%s229 + $0x28] sm:$0xff] %v438
        %447 = vst [vmem:[%s229 + $0x30] sm:$0xff] %v439
        %448 = vst [vmem:[%s229 + $0x38] sm:$0xff] %v440
        %s449 = sand.u32 %s128, 1
        %s450 = scalar_lea.sflag [#allocation3], %s449
        %s451 = sand.u32 %s128, 1
        %s452 = smul.addr %s451, 64
        %s453 = scalar_lea.vmem [#allocation2], %s452
        // Predicated region
        $region33: #{tpu_custom_call.1} parent=31 // pred_check
          %p454 = pneg %p138
        $region34: #{tpu_custom_call.1} parent=31 // pred_check_branch
          %456 = sbr.rel (%p454) target = $region36
        $region35: #{tpu_custom_call.1} parent=31 // pred_region
          %s457 = smul.u32 4, %s24
          %s458 = smul.u32 2, %s23
          %460 = vsyncadd %s450, 0
          %s461 = smul.addr %s457, 2
          %s462 = sadd.s32 %s458, %s461
          %s463 = smul.addr %s22, 8
          %s464 = sadd.s32 %s462, %s463
          %s465 = smul.addr %s464, 8
          %s466 = scalar_lea.hbm %s3, %s465
          %s467 = sshll.u32 %s453, 4
          %s468 = int_to_ptr.vmem [resolvable:$true] %s467
          %s469 = sshll.u32 %s466, 4
          %s470 = int_to_ptr.hbm [resolvable:$true] %s469
          %475 = dma.vmem_to_hbm [thread:$0]  %s468, 1024, %s470, %s450, 256, 256, 16
        $region36: #{tpu_custom_call.1} parent=31 // pred_fallthru
          _
      $region32: #{tpu_custom_call.1} parent=5 // pred_fallthru
        _
      %p476 = scmp.le.s32.totalorder 2, %s12
      // Predicated region
      $region37: #{tpu_custom_call.1} parent=5 // pred_check
        %p477 = pneg %p476
      $region38: #{tpu_custom_call.1} parent=5 // pred_check_branch
        %479 = sbr.rel (%p477) target = $region40
      $region39: #{tpu_custom_call.1} parent=5 // pred_region
        %s480 = ssub.s32 %s12, 2
        // Predicated region
        $region41: #{tpu_custom_call.1} parent=39 // pred_check
          %p481 = pneg %p144
        $region42: #{tpu_custom_call.1} parent=39 // pred_check_branch
          %483 = sbr.rel (%p481) target = $region44
        $region43: #{tpu_custom_call.1} parent=39 // pred_region
          %s484 = sand.u32 %s129, 1
          %s485 = scalar_lea.sflag [#allocation3], %s484
          %s486 = sand.u32 %s129, 1
          %s487 = smul.addr %s486, 64
          %s488 = scalar_lea.vmem [#allocation2], %s487
          %490 = dma.done %s485, 1024
        $region44: #{tpu_custom_call.1} parent=39 // pred_fallthru
          _
      $region40: #{tpu_custom_call.1} parent=5 // pred_fallthru
        _
    $region6: #{tpu_custom_call.1} parent=1 // loop_footer
      %s16 = sadd.s32 1, %s12
    $region7: #{tpu_custom_call.1} parent=1 // loop_footer_branch
      %11 = sbr.rel target = $region3
    $region8: #{tpu_custom_call.1} parent=1 // loop_exit
      _
    %491 = vsyncpa [#allocation3], 1
    %s492 = scalar_lea.sflag [#allocation3], 1
    %493 = vsyncpa %s492, 1

</llo_original>
